<compile_context>
chip_gen: v6e
topology: v6e:2x2x1
jax: 0.10.0
libtpu: 0.0.40
codegen_flags: <defaults>
</compile_context>

<pallas_src>
import functools
import numpy as np
import jax
import jax.numpy as jnp
from jax import lax
from jax.experimental import pallas as pl
from jax.experimental.pallas import tpu as pltpu


def _pick_tiles(bs, L, bytes_per_lane, budget):
    """Pick (b_blk, l_blk) so one block (+temps) fits `budget` bytes.

    bytes_per_lane = bytes per lane column per batch element (in+out blocks
    double buffered in native dtype, plus ~2 full-tile f32 intermediates).
    Prefers an even total grid-step count (v7x megacore balance) and otherwise
    the fewest steps (amortize per-step overhead on v5e/v6e).
    """
    l_blk = L
    if L * bytes_per_lane > budget:
        cands = [L // n for n in range(2, L + 1)
                 if L % n == 0 and (L // n) % 128 == 0
                 and (L // n) * bytes_per_lane <= budget]
        if cands:
            l_blk = max(cands)
        # TODO(synk): heads where L has no fitting 128-multiple divisor fall
        # back to full-L blocks and rely on the raised VMEM limit.
    l_steps = L // l_blk

    fitting = [d for d in range(1, bs + 1)
               if bs % d == 0 and d * l_blk * bytes_per_lane <= budget]
    if not fitting:
        fitting = [1]
    even = [d for d in fitting if ((bs // d) * l_steps) % 2 == 0]
    b_blk = max(even) if even else max(fitting)
    return b_blk, l_blk


def yolo_layer_forward(p_nchw, anchors, nc, img_size, arc="default", training=False):
    """Reproduces YOLOLayer.forward (non-ONNX path).

    Returns (io.view(bs, -1, no), p) in eval mode, or p in training mode,
    where p is the permuted tensor of shape (bs, na, ny, nx, no).
    """
    bs, ch, ny, nx = p_nchw.shape
    na = int(anchors.shape[0])
    no = nc + 5
    assert ch == na * no, f"channel mismatch: {ch} != {na}*{no}"
    L = ny * nx
    stride = float(max(img_size)) / float(max(nx, ny))

    # p.view(bs, na, no, ny, nx).permute(0,1,3,4,2) -- kept in p's dtype.
    p_5d = p_nchw.reshape(bs, na, no, ny, nx)
    p_perm = jnp.transpose(p_5d, (0, 1, 3, 4, 2))  # (bs, na, ny, nx, no)

    if training:
        return p_perm

    # TODO(synk): only arc='default' is implemented ('BCE'/'CE' branches of the
    # PyTorch module are not translated).
    assert "default" in arc

    # Kernel-side layout: (bs, na, no, L), lane-dense, no padding.
    x = p_5d.reshape(bs, na, no, L)

    # Host-precomputed tables.
    # grid bias pre-scaled by stride: (sig + g)*stride = sig*stride + g*stride
    gx = jnp.tile(jnp.arange(nx, dtype=jnp.float32), ny)     # (L,)
    gy = jnp.repeat(jnp.arange(ny, dtype=jnp.float32), nx)   # (L,)
    grid_scaled = jnp.stack([gx, gy], axis=0) * stride        # (2, L)
    # exp(wh) * (anchor/stride) * stride == exp(wh) * anchor
    anchor_tbl = anchors.astype(jnp.float32).reshape(na, 2, 1)

    itemsize = jnp.dtype(p_nchw.dtype).itemsize
    # in+out blocks double-buffered (native dtype) + ~2 full-tile f32 temps.
    bytes_per_lane = na * no * (4 * itemsize + 2 * 4)
    b_blk, l_blk = _pick_tiles(bs, L, bytes_per_lane, budget=12 << 20)
    b_steps, l_steps = bs // b_blk, L // l_blk

    def kernel(grid_ref, awh_ref, x_ref, o_ref):
        # x_ref/o_ref: (b_blk, na, no, l_blk)
        # grid_ref:    (2, l_blk)   grid_xy * stride
        # awh_ref:     (na, 2, 1)   anchors (already in pixel units)
        xv = x_ref[...]                       # native dtype
        sig = jax.nn.sigmoid(xv)              # full-tile sigmoid (obj + cls bulk)
        if nc == 1:
            chan = lax.broadcasted_iota(jnp.int32, (1, 1, no, 1), 2)
            bulk = jnp.where(chan == 5, jnp.ones_like(sig), sig)
        else:
            bulk = sig
        # Single unmasked full-tile store of the dominant block; the small
        # xy / wh sub-ranges are overwritten below (program order preserved).
        o_ref[...] = bulk.astype(o_ref.dtype)

        # xy: f32 accumulation of sigmoid*stride + grid*stride.
        xy = (jax.nn.sigmoid(x_ref[:, :, 0:2, :].astype(jnp.float32)) * stride
              + grid_ref[...][None, None])
        o_ref[:, :, 0:2, :] = xy.astype(o_ref.dtype)

        # wh: exp only on the 2:4 slice, scaled by the per-anchor table.
        wh = (jnp.exp(x_ref[:, :, 2:4, :].astype(jnp.float32))
              * awh_ref[...][None])
        o_ref[:, :, 2:4, :] = wh.astype(o_ref.dtype)

    io_nd = pl.pallas_call(
        kernel,
        out_shape=jax.ShapeDtypeStruct((bs, na, no, L), p_nchw.dtype),
        grid=(b_steps, l_steps),
        in_specs=[
            pl.BlockSpec((2, l_blk), lambda b, l: (0, l)),            # grid_scaled
            pl.BlockSpec((na, 2, 1), lambda b, l: (0, 0, 0)),         # anchor table
            pl.BlockSpec((b_blk, na, no, l_blk), lambda b, l: (b, 0, 0, l)),  # x
        ],
        out_specs=pl.BlockSpec((b_blk, na, no, l_blk), lambda b, l: (b, 0, 0, l)),
        compiler_params=pltpu.CompilerParams(
            dimension_semantics=("parallel", "parallel"),
            vmem_limit_bytes=32 << 20),
    )(grid_scaled, anchor_tbl, x)

    # Module return contract: io.view(bs, -1, no) with channel-last layout.
    # TODO(synk): this transpose is an extra HBM pass; keep (bs,na,no,L) if
    # downstream consumers (NMS/loss) can take the lane-dense layout.
    io = jnp.transpose(io_nd.reshape(bs, na, no, ny, nx),
                       (0, 1, 3, 4, 2)).reshape(bs, -1, no)
    return io, p_perm


def _reference_forward(p_np, anchors_np, nc, img_size):
    """Pure-numpy replica of the PyTorch eval forward (arc='default')."""
    bs, ch, ny, nx = p_np.shape
    na = anchors_np.shape[0]
    no = nc + 5
    stride = max(img_size) / max(nx, ny)
    pp = p_np.reshape(bs, na, no, ny, nx).transpose(0, 1, 3, 4, 2)  # (bs,na,ny,nx,no)
    yv, xv = np.meshgrid(np.arange(ny), np.arange(nx), indexing="ij")
    grid_xy = np.stack((xv, yv), 2).reshape(1, 1, ny, nx, 2).astype(np.float32)
    anchor_wh = (anchors_np / stride).reshape(1, na, 1, 1, 2).astype(np.float32)
    io = pp.astype(np.float32).copy()
    io[..., :2] = 1.0 / (1.0 + np.exp(-io[..., :2])) + grid_xy
    io[..., 2:4] = np.exp(io[..., 2:4]) * anchor_wh
    io[..., :4] *= stride
    io[..., 4:] = 1.0 / (1.0 + np.exp(-io[..., 4:]))
    if nc == 1:
        io[..., 5] = 1.0
    return io.reshape(bs, -1, no), pp


if __name__ == "__main__":
    # Small deterministic config consistent with the module:
    #   na=3 anchors, nc=2 classes -> no=7, input channels = na*no = 21
    #   spatial 16x16, img_size=(64,64) -> stride = 4.0
    bs, nc = 2, 2
    na, no = 3, nc + 5
    ny = nx = 16
    img_size = (64, 64)
    anchors = jnp.array([[10.0, 13.0], [16.0, 30.0], [33.0, 23.0]], dtype=jnp.float32)

    key = jax.random.PRNGKey(0)
    p = jax.random.normal(key, (bs, na * no, ny, nx), dtype=jnp.float32)

    fwd = jax.jit(functools.partial(
        yolo_layer_forward, nc=nc, img_size=img_size, arc="default", training=False))
    io, p_out = fwd(p, anchors)
    jax.block_until_ready(io)
    jax.block_until_ready(p_out)

    io_ref, p_ref = _reference_forward(np.asarray(p), np.asarray(anchors), nc, img_size)
    assert io.shape == io_ref.shape and p_out.shape == p_ref.shape
    np.testing.assert_allclose(np.asarray(p_out), p_ref, rtol=1e-5, atol=1e-5)
    np.testing.assert_allclose(np.asarray(io), io_ref, rtol=1e-3, atol=1e-3)

    print("KERNEL_OK")
</pallas_src>

<mosaic_0001>
module attributes {stable_mosaic.version = 11 : i64} {
  func.func @kernel(%arg0: i32, %arg1: i32, %arg2: memref<2x256xf32, #tpu.memory_space<vmem>>, %arg3: memref<3x2x1xf32, #tpu.memory_space<vmem>>, %arg4: memref<1x3x7x256xf32, #tpu.memory_space<vmem>>, %arg5: memref<1x3x7x256xf32, #tpu.memory_space<vmem>>) attributes {dimension_semantics = [#tpu.dimension_semantics<parallel>, #tpu.dimension_semantics<parallel>], iteration_bounds = array<i64: 2, 1>, scalar_prefetch = 0 : i64, scratch_operands = 0 : i64, tpu.core_type = #tpu.core_type<tc>, window_params = [{transform_indices = @transform_0, window_bounds = array<i64: 2, 256>}, {pipeline_mode = #tpu.pipeline_mode<synchronous>, transform_indices = @transform_1, window_bounds = array<i64: 3, 2, 1>}, {transform_indices = @transform_2, window_bounds = array<i64: 1, 3, 7, 256>}, {transform_indices = @transform_3, window_bounds = array<i64: 1, 3, 7, 256>}]} {
    %c0 = arith.constant 0 : index
    %c0_0 = arith.constant 0 : index
    %c0_1 = arith.constant 0 : index
    %c0_2 = arith.constant 0 : index
    %0 = vector.load %arg4[%c0, %c0_0, %c0_1, %c0_2] : memref<1x3x7x256xf32, #tpu.memory_space<vmem>>, vector<1x3x7x256xf32>
    %1 = arith.negf %0 : vector<1x3x7x256xf32>
    %2 = math.exp %1 : vector<1x3x7x256xf32>
    %cst = arith.constant 1.000000e+00 : f32
    %3 = vector.broadcast %cst : f32 to vector<1x3x7x256xf32>
    %4 = arith.addf %3, %2 : vector<1x3x7x256xf32>
    %5 = arith.divf %3, %4 : vector<1x3x7x256xf32>
    %c0_3 = arith.constant 0 : index
    %c0_4 = arith.constant 0 : index
    %c0_5 = arith.constant 0 : index
    %c0_6 = arith.constant 0 : index
    %6 = vector.load %arg5[%c0_3, %c0_4, %c0_5, %c0_6] : memref<1x3x7x256xf32, #tpu.memory_space<vmem>>, vector<1x3x7x256xf32>
    tpu.vector_store %arg5[%c0_3, %c0_4, %c0_5, %c0_6], %5 {strides = array<i32>} : memref<1x3x7x256xf32, #tpu.memory_space<vmem>>, vector<1x3x7x256xf32>,
    %c0_7 = arith.constant 0 : index
    %c0_8 = arith.constant 0 : index
    %c0_9 = arith.constant 0 : index
    %c0_10 = arith.constant 0 : index
    %7 = vector.load %arg4[%c0_7, %c0_8, %c0_9, %c0_10] : memref<1x3x7x256xf32, #tpu.memory_space<vmem>>, vector<1x3x2x256xf32>
    %8 = arith.negf %7 : vector<1x3x2x256xf32>
    %9 = math.exp %8 : vector<1x3x2x256xf32>
    %cst_11 = arith.constant 1.000000e+00 : f32
    %10 = vector.broadcast %cst_11 : f32 to vector<1x3x2x256xf32>
    %11 = arith.addf %10, %9 : vector<1x3x2x256xf32>
    %12 = arith.divf %10, %11 : vector<1x3x2x256xf32>
    %cst_12 = arith.constant 4.000000e+00 : f32
    %13 = vector.broadcast %cst_12 : f32 to vector<1x3x2x256xf32>
    %14 = arith.mulf %12, %13 : vector<1x3x2x256xf32>
    %c0_13 = arith.constant 0 : index
    %c0_14 = arith.constant 0 : index
    %15 = vector.load %arg2[%c0_13, %c0_14] : memref<2x256xf32, #tpu.memory_space<vmem>>, vector<2x256xf32>
    %16 = vector.shape_cast %15 : vector<2x256xf32> to vector<1x1x2x256xf32>
    %17 = vector.broadcast %16 : vector<1x1x2x256xf32> to vector<1x3x2x256xf32>
    %18 = arith.addf %14, %17 : vector<1x3x2x256xf32>
    %c0_15 = arith.constant 0 : index
    %c0_16 = arith.constant 0 : index
    %c0_17 = arith.constant 0 : index
    %c0_18 = arith.constant 0 : index
    %19 = vector.load %arg5[%c0_15, %c0_16, %c0_17, %c0_18] : memref<1x3x7x256xf32, #tpu.memory_space<vmem>>, vector<1x3x2x256xf32>
    tpu.vector_store %arg5[%c0_15, %c0_16, %c0_17, %c0_18], %18 {strides = array<i32>} : memref<1x3x7x256xf32, #tpu.memory_space<vmem>>, vector<1x3x2x256xf32>,
    %c0_19 = arith.constant 0 : index
    %c0_20 = arith.constant 0 : index
    %c2 = arith.constant 2 : index
    %c0_21 = arith.constant 0 : index
    %20 = vector.load %arg4[%c0_19, %c0_20, %c2, %c0_21] : memref<1x3x7x256xf32, #tpu.memory_space<vmem>>, vector<1x3x2x256xf32>
    %21 = math.exp %20 : vector<1x3x2x256xf32>
    %c0_22 = arith.constant 0 : index
    %c0_23 = arith.constant 0 : index
    %c0_24 = arith.constant 0 : index
    %22 = vector.load %arg3[%c0_22, %c0_23, %c0_24] : memref<3x2x1xf32, #tpu.memory_space<vmem>>, vector<3x2x1xf32>
    %23 = vector.shape_cast %22 : vector<3x2x1xf32> to vector<1x3x2x1xf32>
    %24 = vector.broadcast %23 : vector<1x3x2x1xf32> to vector<1x3x2x256xf32>
    %25 = arith.mulf %21, %24 : vector<1x3x2x256xf32>
    %c0_25 = arith.constant 0 : index
    %c0_26 = arith.constant 0 : index
    %c2_27 = arith.constant 2 : index
    %c0_28 = arith.constant 0 : index
    %26 = vector.load %arg5[%c0_25, %c0_26, %c2_27, %c0_28] : memref<1x3x7x256xf32, #tpu.memory_space<vmem>>, vector<1x3x2x256xf32>
    tpu.vector_store %arg5[%c0_25, %c0_26, %c2_27, %c0_28], %25 {strides = array<i32>} : memref<1x3x7x256xf32, #tpu.memory_space<vmem>>, vector<1x3x2x256xf32>,
    return
  }
  func.func @transform_0(%arg0: i32, %arg1: i32) -> (i32, i32) {
    %c0_i32 = arith.constant 0 : i32
    %c0_i32_0 = arith.constant 0 : i32
    return %c0_i32, %arg1 : i32, i32
  }
  func.func @transform_1(%arg0: i32, %arg1: i32) -> (i32, i32, i32) {
    %c0_i32 = arith.constant 0 : i32
    %c0_i32_0 = arith.constant 0 : i32
    %c0_i32_1 = arith.constant 0 : i32
    %c0_i32_2 = arith.constant 0 : i32
    return %c0_i32, %c0_i32_0, %c0_i32_1 : i32, i32, i32
  }
  func.func @transform_2(%arg0: i32, %arg1: i32) -> (i32, i32, i32, i32) {
    %c0_i32 = arith.constant 0 : i32
    %c0_i32_0 = arith.constant 0 : i32
    %c0_i32_1 = arith.constant 0 : i32
    return %arg0, %c0_i32, %c0_i32_0, %arg1 : i32, i32, i32, i32
  }
  func.func @transform_3(%arg0: i32, %arg1: i32) -> (i32, i32, i32, i32) {
    %c0_i32 = arith.constant 0 : i32
    %c0_i32_0 = arith.constant 0 : i32
    %c0_i32_1 = arith.constant 0 : i32
    return %arg0, %c0_i32, %c0_i32_0, %arg1 : i32, i32, i32, i32
  }
}

</mosaic_0001>

<llo_original>
// kernel: yolo_layer_forward.1
$region0: #{yolo_layer_forward.1}
  #allocation0 [shape = 'u32[]', space=smem, size = 0x4, offset = 0x4, fixed_abs, tag = 'smem constant byte address 0x4 - core index']
  #allocation1 [shape = 'u32[144,128]{1,0:T(1,128)}', space=vmem, size = 0x12000, scoped, tag = 'internal scratch']
  %s0 = inlined_call_operand.vmem [shape: f32[2,256], index: 0, kind: input, shape index: {}]
  %s1 = inlined_call_operand.vmem [shape: f32[3,2,1], index: 1, kind: input, shape index: {}]
  %s2 = inlined_call_operand.vmem [shape: f32[2,3,7,256], index: 2, kind: input, shape index: {}]
  %s3 = inlined_call_operand.vmem [shape: f32[2,3,7,256], index: 3, kind: output, shape index: {}]
  %s4 = sld [smem:[#allocation0]]
  $region45: #{yolo_layer_forward.1} parent=0
    _
  %s6 = ssub.s32 1, %s4
  %s7 = scalar_select 0, %s6, %s4
  loop: start=0, step=1, limit=4
  $region2: #{yolo_layer_forward.1} parent=0 // loop_pre_header
    _
  $region3: #{yolo_layer_forward.1} parent=0 // loop_header
    %s9 = sphi 0, %s13
    %p10 = scmp.ge.s32.totalorder %s9, 4
    %s16 = sphi 0, %s28
    %s17 = sphi 0, %s24
    %s18 = sphi 0, %s16
    %s19 = sphi 0, %s17
    %s20 = sphi 0, %s18
    %s21 = sphi 0, %s19
    %s31 = sphi 0, %s33
    %s34 = sphi 0, %s31
    %s35 = sphi 0, %s34
    %s51 = sphi 0, %s35
    %s55 = sphi 0, %s55
    %s57 = sphi 0, %s55
    %s58 = sphi 0, %s57
    %s72 = sphi 0, %s58
    %s80 = sphi 0, %s82
    %s83 = sphi 0, %s80
    %s84 = sphi 0, %s83
    %s100 = sphi 0, %s84
    %s108 = sphi 0, %s110
    %s111 = sphi 0, %s108
    %s112 = sphi 0, %s111
    %s128 = sphi 0, %s112
  $region4: #{yolo_layer_forward.1} parent=0 // loop_header_branch
    %12 = sbr.rel (%p10) target = $region8
  $region5: #{yolo_layer_forward.1} parent=0 // loop_body
    %s14 = ssub.s32 %s9, 1
    %s15 = ssub.s32 %s9, 2
    %s22 = sadd.s32 1, %s17
    %p23 = scmp.ge.s32.totalorder %s22, 1
    %s24 = scalar_select %p23, 0, %s22
    %s25 = sadd.s32 1, %s16
    %s26 = scalar_select %p23, %s25, %s16
    %p27 = scmp.ge.s32.totalorder %s26, 2
    %s28 = scalar_select %p27, 0, %s26
    %s29 = ssub.s32 %s17, %s24
    %p30 = scmp.eq.s32.totalorder %s29, 0
    %s32 = sadd.s32 %s31, 1
    %s33 = scalar_select %p30, %s31, %s32
    %p36 = pneg %p30
    %p37 = scmp.eq.s32.totalorder %s9, 1
    %p38 = por %p36, %p37
    %p39 = scmp.ne.s32.totalorder %s31, %s34
    %p40 = scmp.eq.s32.totalorder %s9, 0
    %p41 = por %p39, %p40
    %p42 = scmp.ne.s32.totalorder %s31, %s34
    %p43 = scmp.eq.s32.totalorder %s14, 1
    %p44 = por %p42, %p43
    %p45 = scmp.ne.s32.totalorder %s34, %s35
    %p46 = scmp.eq.s32.totalorder %s14, 0
    %p47 = por %p45, %p46
    %p48 = scmp.ne.s32.totalorder %s34, %s35
    %p49 = scmp.eq.s32.totalorder %s15, 1
    %p50 = por %p48, %p49
    %p52 = scmp.ne.s32.totalorder %s35, %s51
    %p53 = scmp.eq.s32.totalorder %s15, 0
    %p54 = por %p52, %p53
    %s56 = sadd.s32 %s55, 1
    %p59 = scmp.eq.s32.totalorder %s9, 1
    %p60 = scmp.ne.s32.totalorder %s55, %s57
    %p61 = scmp.eq.s32.totalorder %s9, 0
    %p62 = por %p60, %p61
    %p63 = scmp.ne.s32.totalorder %s55, %s57
    %p64 = scmp.eq.s32.totalorder %s14, 1
    %p65 = por %p63, %p64
    %p66 = scmp.ne.s32.totalorder %s57, %s58
    %p67 = scmp.eq.s32.totalorder %s14, 0
    %p68 = por %p66, %p67
    %p69 = scmp.ne.s32.totalorder %s57, %s58
    %p70 = scmp.eq.s32.totalorder %s15, 1
    %p71 = por %p69, %p70
    %p73 = scmp.ne.s32.totalorder %s58, %s72
    %p74 = scmp.eq.s32.totalorder %s15, 0
    %p75 = por %p73, %p74
    %s76 = ssub.s32 %s16, %s28
    %s77 = ssub.s32 %s17, %s24
    %s78 = sor.u32 %s76, %s77
    %p79 = scmp.eq.s32.totalorder %s78, 0
    %s81 = sadd.s32 %s80, 1
    %s82 = scalar_select %p79, %s80, %s81
    %p85 = pneg %p79
    %p86 = scmp.eq.s32.totalorder %s9, 1
    %p87 = por %p85, %p86
    %p88 = scmp.ne.s32.totalorder %s80, %s83
    %p89 = scmp.eq.s32.totalorder %s9, 0
    %p90 = por %p88, %p89
    %p91 = scmp.ne.s32.totalorder %s80, %s83
    %p92 = scmp.eq.s32.totalorder %s14, 1
    %p93 = por %p91, %p92
    %p94 = scmp.ne.s32.totalorder %s83, %s84
    %p95 = scmp.eq.s32.totalorder %s14, 0
    %p96 = por %p94, %p95
    %p97 = scmp.ne.s32.totalorder %s83, %s84
    %p98 = scmp.eq.s32.totalorder %s15, 1
    %p99 = por %p97, %p98
    %p101 = scmp.ne.s32.totalorder %s84, %s100
    %p102 = scmp.eq.s32.totalorder %s15, 0
    %p103 = por %p101, %p102
    %s104 = ssub.s32 %s16, %s28
    %s105 = ssub.s32 %s17, %s24
    %s106 = sor.u32 %s104, %s105
    %p107 = scmp.eq.s32.totalorder %s106, 0
    %s109 = sadd.s32 %s108, 1
    %s110 = scalar_select %p107, %s108, %s109
    %p113 = pneg %p107
    %p114 = scmp.eq.s32.totalorder %s9, 1
    %p115 = por %p113, %p114
    %p116 = scmp.ne.s32.totalorder %s108, %s111
    %p117 = scmp.eq.s32.totalorder %s9, 0
    %p118 = por %p116, %p117
    %p119 = scmp.ne.s32.totalorder %s108, %s111
    %p120 = scmp.eq.s32.totalorder %s14, 1
    %p121 = por %p119, %p120
    %p122 = scmp.ne.s32.totalorder %s111, %s112
    %p123 = scmp.eq.s32.totalorder %s14, 0
    %p124 = por %p122, %p123
    %p125 = scmp.ne.s32.totalorder %s111, %s112
    %p126 = scmp.eq.s32.totalorder %s15, 1
    %p127 = por %p125, %p126
    %p129 = scmp.ne.s32.totalorder %s112, %s128
    %p130 = scmp.eq.s32.totalorder %s15, 0
    %p131 = por %p129, %p130
    %p132 = scmp.le.s32.totalorder 1, %s9
    %p133 = scmp.lt.s32.totalorder %s9, 3
    %p134 = pnand %p132, %p133
    %p135 = pneg %p134
    // Predicated region
    $region9: #{yolo_layer_forward.1} parent=5 // pred_check
      _
    $region10: #{yolo_layer_forward.1} parent=5 // pred_check_branch
      %137 = sbr.rel (%p134) target = $region12
    $region11: #{yolo_layer_forward.1} parent=5 // pred_region
      %s138 = ssub.s32 %s9, 1
      // Predicated region
      $region13: #{yolo_layer_forward.1} parent=11 // pred_check
        %p139 = pneg %p47
      $region14: #{yolo_layer_forward.1} parent=11 // pred_check_branch
        %141 = sbr.rel (%p139) target = $region16
      $region15: #{yolo_layer_forward.1} parent=11 // pred_region
        %s142 = smul.u32 2, %s19
        %p143 = scmp.lt.s32.totalorder %s142, 1
        %s144 = scalar_select %p143, %s142, 1
        %s145 = smul.addr %s144, 2
        %s146 = scalar_lea.vmem %s0, %s145
        %s147 = smul.u32 2, %s19
      $region16: #{yolo_layer_forward.1} parent=11 // pred_fallthru
        _
      // Predicated region
      $region17: #{yolo_layer_forward.1} parent=11 // pred_check
        %p148 = pneg %p68
      $region18: #{yolo_layer_forward.1} parent=11 // pred_check_branch
        %150 = sbr.rel (%p148) target = $region20
      $region19: #{yolo_layer_forward.1} parent=11 // pred_region
        _
      $region20: #{yolo_layer_forward.1} parent=11 // pred_fallthru
        _
    $region12: #{yolo_layer_forward.1} parent=5 // pred_fallthru
      _
    %p151 = scmp.lt.s32.totalorder %s9, 2
    // Predicated region
    $region21: #{yolo_layer_forward.1} parent=5 // pred_check
      %p152 = pneg %p151
    $region22: #{yolo_layer_forward.1} parent=5 // pred_check_branch
      %154 = sbr.rel (%p152) target = $region24
    $region23: #{yolo_layer_forward.1} parent=5 // pred_region
      // Predicated region
      $region25: #{yolo_layer_forward.1} parent=23 // pred_check
        %p155 = pneg %p90
      $region26: #{yolo_layer_forward.1} parent=23 // pred_check_branch
        %157 = sbr.rel (%p155) target = $region28
      $region27: #{yolo_layer_forward.1} parent=23 // pred_region
        %s158 = smul.u32 2, %s17
        %p159 = scmp.lt.s32.totalorder %s16, 1
        %s160 = scalar_select %p159, %s16, 1
        %p161 = scmp.lt.s32.totalorder %s158, 1
        %s162 = scalar_select %p161, %s158, 1
        %s163 = smul.addr %s160, 6
        %s164 = sadd.s32 %s162, %s163
        %s165 = smul.addr %s164, 8
        %s166 = scalar_lea.vmem %s2, %s165
        %s167 = smul.u32 2, %s17
      $region28: #{yolo_layer_forward.1} parent=23 // pred_fallthru
        _
    $region24: #{yolo_layer_forward.1} parent=5 // pred_fallthru
      _
    %p168 = scmp.le.s32.totalorder 1, %s9
    %p169 = scmp.lt.s32.totalorder %s9, 3
    %p170 = pnand %p168, %p169
    %p171 = pneg %p170
    // Predicated region
    $region29: #{yolo_layer_forward.1} parent=5 // pred_check
      _
    $region30: #{yolo_layer_forward.1} parent=5 // pred_check_branch
      %173 = sbr.rel (%p170) target = $region32
    $region31: #{yolo_layer_forward.1} parent=5 // pred_region
      %s174 = ssub.s32 %s9, 1
      %s175 = smul.u32 2, %s19
      %p176 = scmp.lt.s32.totalorder %s175, 1
      %s177 = scalar_select %p176, %s175, 1
      %s178 = smul.addr %s177, 2
      %s179 = scalar_lea.vmem %s0, %s178
      %p180 = pneg %p47
      %p181 = pneg %p44
      %p182 = pneg %p68
      %p183 = pneg %p65
      %s184 = smul.u32 2, %s19
      %p185 = scmp.lt.s32.totalorder %s18, 1
      %s186 = scalar_select %p185, %s18, 1
      %p187 = scmp.lt.s32.totalorder %s184, 1
      %s188 = scalar_select %p187, %s184, 1
      %s189 = smul.addr %s186, 6
      %s190 = sadd.s32 %s188, %s189
      %s191 = smul.addr %s190, 8
      %s192 = scalar_lea.vmem %s2, %s191
      %p193 = pneg %p96
      %p194 = pneg %p93
      %p195 = pneg %p124
      %p196 = pneg %p121
      %s197 = smul.u32 2, %s19
      %p198 = scmp.lt.s32.totalorder %s18, 1
      %s199 = scalar_select %p198, %s18, 1
      %p200 = scmp.lt.s32.totalorder %s197, 1
      %s201 = scalar_select %p200, %s197, 1
      %s202 = smul.addr %s199, 6
      %s203 = sadd.s32 %s201, %s202
      %s204 = smul.addr %s203, 8
      %s205 = scalar_lea.vmem %s3, %s204
      %s206 = smul.u32 2, %s19
      %p207 = scmp.lt.s32.totalorder %s206, 1
      %s208 = scalar_select %p207, %s206, 1
      %s209 = smul.addr %s208, 2
      %s210 = scalar_lea.vmem %s0, %s209
      %s211 = smul.u32 2, %s19
      %s212 = smul.u32 2, %s19
      %p213 = scmp.lt.s32.totalorder %s18, 1
      %s214 = scalar_select %p213, %s18, 1
      %p215 = scmp.lt.s32.totalorder %s212, 1
      %s216 = scalar_select %p215, %s212, 1
      %s217 = smul.addr %s214, 6
      %s218 = sadd.s32 %s216, %s217
      %s219 = smul.addr %s218, 8
      %s220 = scalar_lea.vmem %s2, %s219
      %s221 = smul.u32 2, %s19
      %s222 = smul.u32 2, %s19
      %p223 = scmp.lt.s32.totalorder %s18, 1
      %s224 = scalar_select %p223, %s18, 1
      %p225 = scmp.lt.s32.totalorder %s222, 1
      %s226 = scalar_select %p225, %s222, 1
      %s227 = smul.addr %s224, 6
      %s228 = sadd.s32 %s226, %s227
      %s229 = smul.addr %s228, 8
      %s230 = scalar_lea.vmem %s3, %s229
      %s231 = smul.u32 2, %s19
      %v232 = vld [vmem:[%s220] sm:$0x7f]
      %v233 = vld [vmem:[%s220 + $0x8] sm:$0x7f]
      %v234 = vld [vmem:[%s220 + $0x10] sm:$0x7f]
      %v235 = vld [vmem:[%s220 + $0x18] sm:$0x7f]
      %v236 = vld [vmem:[%s220 + $0x20] sm:$0x7f]
      %v237 = vld [vmem:[%s220 + $0x28] sm:$0x7f]
      %v238 = vxor.u32 %v232, 2147483648
      %v239 = vxor.u32 %v233, 2147483648
      %v240 = vxor.u32 %v234, 2147483648
      %v241 = vxor.u32 %v235, 2147483648
      %v242 = vxor.u32 %v236, 2147483648
      %v243 = vxor.u32 %v237, 2147483648
      %v244 = vmul.f32 %v238, 1.442695
      %v245 = vpow.pop %v244
      %v246 = vmul.f32 %v239, 1.442695
      %v247 = vpow.pop %v246
      %v248 = vmul.f32 %v240, 1.442695
      %v249 = vpow.pop %v248
      %v250 = vmul.f32 %v241, 1.442695
      %v251 = vpow.pop %v250
      %v252 = vmul.f32 %v242, 1.442695
      %v253 = vpow.pop %v252
      %v254 = vmul.f32 %v243, 1.442695
      %v255 = vpow.pop %v254
      %v256 = vadd.f32 %v245, 1.0
      %v257 = vadd.f32 %v247, 1.0
      %v258 = vadd.f32 %v249, 1.0
      %v259 = vadd.f32 %v251, 1.0
      %v260 = vadd.f32 %v253, 1.0
      %v261 = vadd.f32 %v255, 1.0
      %v262 = vrcp.pop %v256
      %v263 = vmul.f32 1.0, %v262
      %v264 = vrcp.pop %v257
      %v265 = vmul.f32 1.0, %v264
      %v266 = vrcp.pop %v258
      %v267 = vmul.f32 1.0, %v266
      %v268 = vrcp.pop %v259
      %v269 = vmul.f32 1.0, %v268
      %v270 = vrcp.pop %v260
      %v271 = vmul.f32 1.0, %v270
      %v272 = vrcp.pop %v261
      %v273 = vmul.f32 1.0, %v272
      %274 = vst [vmem:[%s230] sm:$0x7f] %v263
      %275 = vst [vmem:[%s230 + $0x8] sm:$0x7f] %v265
      %276 = vst [vmem:[%s230 + $0x10] sm:$0x7f] %v267
      %277 = vst [vmem:[%s230 + $0x18] sm:$0x7f] %v269
      %278 = vst [vmem:[%s230 + $0x20] sm:$0x7f] %v271
      %279 = vst [vmem:[%s230 + $0x28] sm:$0x7f] %v273
      %v280 = vld [vmem:[%s220] sm:$0x3]
      %v281 = vld [vmem:[%s220 + $0x8] sm:$0x3]
      %v282 = vld [vmem:[%s220 + $0x10] sm:$0x3]
      %v283 = vld [vmem:[%s220 + $0x18] sm:$0x3]
      %v284 = vld [vmem:[%s220 + $0x20] sm:$0x3]
      %v285 = vld [vmem:[%s220 + $0x28] sm:$0x3]
      %v286 = vxor.u32 %v280, 2147483648
      %v287 = vxor.u32 %v281, 2147483648
      %v288 = vxor.u32 %v282, 2147483648
      %v289 = vxor.u32 %v283, 2147483648
      %v290 = vxor.u32 %v284, 2147483648
      %v291 = vxor.u32 %v285, 2147483648
      %v292 = vmul.f32 %v286, 1.442695
      %v293 = vpow.pop %v292
      %v294 = vmul.f32 %v287, 1.442695
      %v295 = vpow.pop %v294
      %v296 = vmul.f32 %v288, 1.442695
      %v297 = vpow.pop %v296
      %v298 = vmul.f32 %v289, 1.442695
      %v299 = vpow.pop %v298
      %v300 = vmul.f32 %v290, 1.442695
      %v301 = vpow.pop %v300
      %v302 = vmul.f32 %v291, 1.442695
      %v303 = vpow.pop %v302
      %v304 = vadd.f32 %v293, 1.0
      %v305 = vadd.f32 %v295, 1.0
      %v306 = vadd.f32 %v297, 1.0
      %v307 = vadd.f32 %v299, 1.0
      %v308 = vadd.f32 %v301, 1.0
      %v309 = vadd.f32 %v303, 1.0
      %v310 = vrcp.pop %v304
      %v311 = vmul.f32 1.0, %v310
      %v312 = vrcp.pop %v305
      %v313 = vmul.f32 1.0, %v312
      %v314 = vrcp.pop %v306
      %v315 = vmul.f32 1.0, %v314
      %v316 = vrcp.pop %v307
      %v317 = vmul.f32 1.0, %v316
      %v318 = vrcp.pop %v308
      %v319 = vmul.f32 1.0, %v318
      %v320 = vrcp.pop %v309
      %v321 = vmul.f32 1.0, %v320
      %v322 = vmul.f32 %v311, 4.0
      %v323 = vmul.f32 %v313, 4.0
      %v324 = vmul.f32 %v315, 4.0
      %v325 = vmul.f32 %v317, 4.0
      %v326 = vmul.f32 %v319, 4.0
      %v327 = vmul.f32 %v321, 4.0
      %v328 = vld [vmem:[%s210] sm:$0xf]
      %v331 = vunpack.c.l.s4 1983009808
      %v332 = vunpack.c.0.s8 %v331
      %v333 = vlaneseq
      %v334 = vshrl.u32 %v333, 7
      %v335 = vsub.s32 %v332, %v334
      %v336 = vrot.slane %v328, %v335
      %v337 = vcombine.high %v336, %v336
      %v340 = vadd.f32 %v322, %v336
      %v341 = vadd.f32 %v323, %v337
      %v342 = vadd.f32 %v324, %v336
      %v343 = vadd.f32 %v325, %v337
      %v344 = vadd.f32 %v326, %v336
      %v345 = vadd.f32 %v327, %v337
      %346 = vst [vmem:[%s230] sm:$0x3] %v340
      %347 = vst [vmem:[%s230 + $0x8] sm:$0x3] %v341
      %348 = vst [vmem:[%s230 + $0x10] sm:$0x3] %v342
      %349 = vst [vmem:[%s230 + $0x18] sm:$0x3] %v343
      %350 = vst [vmem:[%s230 + $0x20] sm:$0x3] %v344
      %351 = vst [vmem:[%s230 + $0x28] sm:$0x3] %v345
      %v352 = vld [vmem:[%s220] sm:$0xc]
      %v353 = vld [vmem:[%s220 + $0x8] sm:$0xc]
      %v354 = vld [vmem:[%s220 + $0x10] sm:$0xc]
      %v355 = vld [vmem:[%s220 + $0x18] sm:$0xc]
      %v356 = vld [vmem:[%s220 + $0x20] sm:$0xc]
      %v357 = vld [vmem:[%s220 + $0x28] sm:$0xc]
      %v358 = vmul.f32 %v352, 1.442695
      %v359 = vpow.pop %v358
      %v360 = vmul.f32 %v353, 1.442695
      %v361 = vpow.pop %v360
      %v362 = vmul.f32 %v354, 1.442695
      %v363 = vpow.pop %v362
      %v364 = vmul.f32 %v355, 1.442695
      %v365 = vpow.pop %v364
      %v366 = vmul.f32 %v356, 1.442695
      %v367 = vpow.pop %v366
      %v368 = vmul.f32 %v357, 1.442695
      %v369 = vpow.pop %v368
      %v370 = vld [vmem:[%s1] sm:$0x3]
      %v371 = vld [vmem:[%s1 + $0x2] sm:$0x3]
      %v372 = vld [vmem:[%s1 + $0x4] sm:$0x3]
      %374 = vset.pattern.permute.xlu0 0
      %375 = vperm.xlu0 %374, %v370
      %v376 = vpop.permute.xlu0 %375
      %378 = vset.pattern.permute.xlu0 0
      %379 = vperm.xlu0 %378, %v371
      %v380 = vpop.permute.xlu0 %379
      %382 = vset.pattern.permute.xlu0 0
      %383 = vperm.xlu0 %382, %v372
      %v384 = vpop.permute.xlu0 %383
      %v385 = vrot.slane %v376, 6
      %v386 = vrot.slane %v380, 6
      %v387 = vrot.slane %v384, 6
      %v391 = vmul.f32 %v359, %v385
      %v392 = vmul.f32 %v361, %v385
      %v393 = vmul.f32 %v363, %v386
      %v394 = vmul.f32 %v365, %v386
      %v395 = vmul.f32 %v367, %v387
      %v396 = vmul.f32 %v369, %v387
      %397 = vst [vmem:[%s230] sm:$0xc] %v391
      %398 = vst [vmem:[%s230 + $0x8] sm:$0xc] %v392
      %399 = vst [vmem:[%s230 + $0x10] sm:$0xc] %v393
      %400 = vst [vmem:[%s230 + $0x18] sm:$0xc] %v394
      %401 = vst [vmem:[%s230 + $0x20] sm:$0xc] %v395
      %402 = vst [vmem:[%s230 + $0x28] sm:$0xc] %v396
      %s403 = smul.u32 2, %s19
      %p404 = scmp.lt.s32.totalorder %s18, 1
      %s405 = scalar_select %p404, %s18, 1
      %p406 = scmp.lt.s32.totalorder %s403, 1
      %s407 = scalar_select %p406, %s403, 1
      %s408 = smul.addr %s405, 6
      %s409 = sadd.s32 %s407, %s408
      %s410 = smul.addr %s409, 8
      %s411 = scalar_lea.vmem %s3, %s410
      // Predicated region
      $region33: #{yolo_layer_forward.1} parent=31 // pred_check
        %p412 = pneg %p121
      $region34: #{yolo_layer_forward.1} parent=31 // pred_check_branch
        %414 = sbr.rel (%p412) target = $region36
      $region35: #{yolo_layer_forward.1} parent=31 // pred_region
        %s415 = smul.u32 2, %s19
      $region36: #{yolo_layer_forward.1} parent=31 // pred_fallthru
        _
    $region32: #{yolo_layer_forward.1} parent=5 // pred_fallthru
      _
    %p416 = scmp.le.s32.totalorder 2, %s9
    // Predicated region
    $region37: #{yolo_layer_forward.1} parent=5 // pred_check
      %p417 = pneg %p416
    $region38: #{yolo_layer_forward.1} parent=5 // pred_check_branch
      %419 = sbr.rel (%p417) target = $region40
    $region39: #{yolo_layer_forward.1} parent=5 // pred_region
      %s420 = ssub.s32 %s9, 2
      // Predicated region
      $region41: #{yolo_layer_forward.1} parent=39 // pred_check
        %p421 = pneg %p127
      $region42: #{yolo_layer_forward.1} parent=39 // pred_check_branch
        %423 = sbr.rel (%p421) target = $region44
      $region43: #{yolo_layer_forward.1} parent=39 // pred_region
        %s424 = smul.u32 2, %s21
        %p425 = scmp.lt.s32.totalorder %s20, 1
        %s426 = scalar_select %p425, %s20, 1
        %p427 = scmp.lt.s32.totalorder %s424, 1
        %s428 = scalar_select %p427, %s424, 1
        %s429 = smul.addr %s426, 6
        %s430 = sadd.s32 %s428, %s429
        %s431 = smul.addr %s430, 8
        %s432 = scalar_lea.vmem %s3, %s431
      $region44: #{yolo_layer_forward.1} parent=39 // pred_fallthru
        _
    $region40: #{yolo_layer_forward.1} parent=5 // pred_fallthru
      _
  $region6: #{yolo_layer_forward.1} parent=0 // loop_footer
    %s13 = sadd.s32 1, %s9
  $region7: #{yolo_layer_forward.1} parent=0 // loop_footer_branch
    %8 = sbr.rel target = $region3
  $region8: #{yolo_layer_forward.1} parent=0 // loop_exit
    _

</llo_original>
